<compile_context>
chip_gen: v6e
topology: v6e:2x2x1
jax: 0.10.0
libtpu: 0.0.40
codegen_flags: <defaults>
</compile_context>

<pallas_src>
import functools

import jax
import jax.numpy as jnp
from jax.experimental import pallas as pl
from jax.experimental.pallas import tpu as pltpu


_ONE_HOT_VOCAB_LIMIT = 2048  # above this, the one-hot path stops making sense


def _embedding_onehot_kernel(ids_ref, table_ref, out_ref):
    """One grid step: gather PACK*rows embedding rows via one bf16 MXU matmul.

    ids_ref   : VMEM (rows, PACK)            int32  token ids (PACK per out row)
    table_ref : VMEM (PACK*V, PACK*D)        bf16   block-diagonal table (resident)
    out_ref   : VMEM (rows, PACK*D)          f32    packed gathered rows
    """
    rows, pack = ids_ref.shape
    kdim = table_ref.shape[0]          # PACK * V
    vocab = kdim // pack

    ids = ids_ref[...]                                               # (rows, PACK)
    # Slot j of a packed output row selects from vocab sub-range [j*V, (j+1)*V),
    # which the block-diagonal table maps onto lanes [j*D, (j+1)*D).
    sid = ids + jax.lax.broadcasted_iota(jnp.int32, (rows, pack), 1) * vocab
    cols = jax.lax.broadcasted_iota(jnp.int32, (rows, kdim), 1)

    hit = cols == sid[:, 0:1]
    for j in range(1, pack):           # static, tiny unroll (PACK <= 128)
        hit = jnp.logical_or(hit, cols == sid[:, j:j + 1])
    onehot = hit.astype(table_ref.dtype)                             # bf16 one-hot

    # bf16 x bf16 -> f32 accumulate: exact for 0/1 weights and bf16 table values.
    out_ref[...] = jnp.dot(
        onehot, table_ref[...], preferred_element_type=jnp.float32
    ).astype(out_ref.dtype)


def _block_diag_table(table, pack):
    """(V, D) table -> (pack*V, pack*D) bf16 block-diagonal kernel operand."""
    v, d = table.shape
    t16 = table.astype(jnp.bfloat16)
    if pack == 1:
        return t16
    bt = jnp.zeros((pack * v, pack * d), dtype=jnp.bfloat16)
    for j in range(pack):
        bt = bt.at[j * v:(j + 1) * v, j * d:(j + 1) * d].set(t16)
    return bt


def make_embedding_forward(table, *, max_tile_tokens=512, out_dtype=jnp.float32):
    """Build forward(x) = table[x] as a Pallas TPU kernel.

    `table` is the (n_tokens, emb_dim) float32 embedding weight (module's
    self.embedding.weight).  Packing / bf16 conversion is done once here
    ("at init"), not per call.
    """
    n_tokens, emb_dim = table.shape

    if n_tokens > _ONE_HOT_VOCAB_LIMIT:
        # TODO(synk): HBM-streamed scalar-prefetch / manual-DMA row gather for
        # large vocabularies (the only viable path once the table outgrows VMEM,
        # especially on v7x's 64 MiB).  Plain XLA gather fallback for now.
        return jax.jit(
            lambda x: jnp.take(table, jnp.clip(x, 0, n_tokens - 1), axis=0)
            .astype(out_dtype)
        )

    # Pack PACK consecutive tokens per 128-lane output row (lane-dense stores).
    pack = 128 // emb_dim if (emb_dim < 128 and 128 % emb_dim == 0) else 1
    table_packed = _block_diag_table(table, pack)       # (pack*V, pack*D) bf16
    kdim, ndim = table_packed.shape
    out_itemsize = jnp.dtype(out_dtype).itemsize

    def forward(x):
        idx = jnp.clip(x.reshape(-1).astype(jnp.int32), 0, n_tokens - 1)
        n = idx.shape[0]
        n_rows = pl.cdiv(n, pack)

        # Tile selection: biggest MXU-friendly tile, no padding for small inputs.
        max_rows = max(((max_tile_tokens // pack) // 8) * 8, 8)
        if n_rows <= max_rows:
            tile_rows, n_tiles = n_rows, 1
        else:
            tile_rows = max_rows
            n_tiles = pl.cdiv(n_rows, tile_rows)
        n_rows_pad = tile_rows * n_tiles
        n_pad = n_rows_pad * pack

        if n_pad != n:
            # Padded slots gather row 0 (the zero padding token) and are sliced
            # off below; callers never see them.
            idx = jnp.pad(idx, (0, n_pad - n))
        ids2d = idx.reshape(n_rows_pad, pack)

        cost = pl.CostEstimate(
            flops=2 * n_rows_pad * kdim * ndim,
            transcendentals=0,
            bytes_accessed=(
                n_pad * 4                      # indices
                + kdim * ndim * 2              # resident bf16 table, counted once
                + n_rows_pad * ndim * out_itemsize  # output writeback
            ),
        )

        vmem_needed = (
            kdim * ndim * 2                                  # resident table
            + 2 * tile_rows * ndim * out_itemsize            # double-buffered out
            + 2 * tile_rows * pack * 4                       # double-buffered ids
            + (2 << 20)                                      # headroom
        )
        vmem_limit = int(min(64 << 20, max(vmem_needed, 16 << 20)))

        out_packed = pl.pallas_call(
            _embedding_onehot_kernel,
            out_shape=jax.ShapeDtypeStruct((n_rows_pad, ndim), out_dtype),
            grid=(n_tiles,),
            in_specs=[
                pl.BlockSpec((tile_rows, pack), lambda i: (i, 0)),      # ids tile
                pl.BlockSpec(memory_space=pltpu.MemorySpace.VMEM),      # table, single-buffered
            ],
            out_specs=pl.BlockSpec((tile_rows, ndim), lambda i: (i, 0)),
            compiler_params=pltpu.CompilerParams(
                dimension_semantics=("parallel",),
                vmem_limit_bytes=vmem_limit,
            ),
            cost_estimate=cost,
        )(ids2d, table_packed)

        # (n_rows_pad, pack*D) -> (n_pad, D): pure row-major relabel, no copy.
        out = out_packed.reshape(n_pad, emb_dim)
        if n_pad != n:
            out = out[:n]
        return out.reshape(x.shape + (emb_dim,))

    return jax.jit(forward)


def build_representer_params(key, n_tracks, emb_dim):
    """Deterministic synthetic stand-in for the module's __init__.

    Mirrors the construction of `self.embedding`: an (n_tokens, emb_dim) table
    whose first and last rows are zero padding tokens and whose interior rows
    come from a (synthetic) song-embedding matrix.  Values are rounded to
    bf16-representable f32 so the bf16 one-hot MXU path is bit-exact vs. a
    gather.
    """
    n_tokens = n_tracks + 2
    song_emb = jax.random.normal(key, (n_tracks, emb_dim), dtype=jnp.float32)
    song_emb = song_emb.astype(jnp.bfloat16).astype(jnp.float32)
    table = jnp.zeros((n_tokens, emb_dim), dtype=jnp.float32)
    table = table.at[1:n_tokens - 1, :].set(song_emb)
    # NOTE: album / artist / pop / dur embedding tables built in __init__ are
    # not used by forward(), so they are omitted here.
    return table


if __name__ == "__main__":
    key = jax.random.PRNGKey(0)
    k_emb, k_idx = jax.random.split(key)

    n_tracks = 60          # -> n_tokens = 62
    emb_dim = 32
    batch, seq = 2, 8

    table = build_representer_params(k_emb, n_tracks, emb_dim)
    n_tokens = table.shape[0]

    # token ids, same role as the LongTensor `x` in the PyTorch forward
    x = jax.random.randint(k_idx, (batch, seq), 0, n_tokens, dtype=jnp.int32)

    forward = make_embedding_forward(table)
    y = forward(x)
    y = jax.block_until_ready(y)

    # reference check against plain JAX gather (== nn.Embedding semantics)
    y_ref = jnp.take(table, x, axis=0)
    assert y.shape == (batch, seq, emb_dim)
    assert y.dtype == jnp.float32
    assert jnp.allclose(y, y_ref), "Pallas embedding gather mismatch vs reference"

    print("KERNEL_OK")
</pallas_src>

<mosaic_0001>
module attributes {stable_mosaic.version = 11 : i64} {
  func.func @_embedding_onehot_kernel(%arg0: i32, %arg1: memref<4x4xi32, #tpu.memory_space<vmem>>, %arg2: memref<248x128xbf16, #tpu.memory_space<vmem>>, %arg3: memref<4x128xf32, #tpu.memory_space<vmem>>) attributes {dimension_semantics = [#tpu.dimension_semantics<parallel>], iteration_bounds = array<i64: 1>, scalar_prefetch = 0 : i64, scratch_operands = 0 : i64, tpu.core_type = #tpu.core_type<tc>, window_params = [{transform_indices = @transform_0, window_bounds = array<i64: 4, 4>}, {pipeline_mode = #tpu.pipeline_mode<synchronous>, transform_indices = @transform_1, window_bounds = array<i64: 248, 128>}, {transform_indices = @transform_2, window_bounds = array<i64: 4, 128>}]} {
    %c0 = arith.constant 0 : index
    %c0_0 = arith.constant 0 : index
    %0 = vector.load %arg1[%c0, %c0_0] : memref<4x4xi32, #tpu.memory_space<vmem>>, vector<4x4xi32>
    %1 = tpu.iota {dimensions = array<i32: 1>} : vector<4x4xi32>
    %c62_i32 = arith.constant 62 : i32
    %2 = vector.broadcast %c62_i32 : i32 to vector<4x4xi32>
    %3 = arith.muli %1, %2 : vector<4x4xi32>
    %4 = arith.addi %0, %3 : vector<4x4xi32>
    %5 = tpu.iota {dimensions = array<i32: 1>} : vector<4x248xi32>
    %6 = vector.extract_strided_slice %4 {offsets = [0, 0], sizes = [4, 1], strides = [1, 1]} : vector<4x4xi32> to vector<4x1xi32>
    %7 = vector.broadcast %6 : vector<4x1xi32> to vector<4x248xi32>
    %8 = arith.cmpi eq, %5, %7 : vector<4x248xi32>
    %9 = vector.extract_strided_slice %4 {offsets = [0, 1], sizes = [4, 1], strides = [1, 1]} : vector<4x4xi32> to vector<4x1xi32>
    %10 = vector.broadcast %9 : vector<4x1xi32> to vector<4x248xi32>
    %11 = arith.cmpi eq, %5, %10 : vector<4x248xi32>
    %12 = arith.ori %8, %11 : vector<4x248xi1>
    %13 = vector.extract_strided_slice %4 {offsets = [0, 2], sizes = [4, 1], strides = [1, 1]} : vector<4x4xi32> to vector<4x1xi32>
    %14 = vector.broadcast %13 : vector<4x1xi32> to vector<4x248xi32>
    %15 = arith.cmpi eq, %5, %14 : vector<4x248xi32>
    %16 = arith.ori %12, %15 : vector<4x248xi1>
    %17 = vector.extract_strided_slice %4 {offsets = [0, 3], sizes = [4, 1], strides = [1, 1]} : vector<4x4xi32> to vector<4x1xi32>
    %18 = vector.broadcast %17 : vector<4x1xi32> to vector<4x248xi32>
    %19 = arith.cmpi eq, %5, %18 : vector<4x248xi32>
    %20 = arith.ori %16, %19 : vector<4x248xi1>
    %21 = arith.extui %20 : vector<4x248xi1> to vector<4x248xi32>
    %22 = arith.sitofp %21 : vector<4x248xi32> to vector<4x248xf32>
    %23 = arith.truncf %22 : vector<4x248xf32> to vector<4x248xbf16>
    %c0_1 = arith.constant 0 : index
    %c0_2 = arith.constant 0 : index
    %24 = vector.load %arg2[%c0_1, %c0_2] : memref<248x128xbf16, #tpu.memory_space<vmem>>, vector<248x128xbf16>
    %cst = arith.constant dense<0.000000e+00> : vector<4x128xf32>
    %25 = tpu.matmul %23, %24, %cst {dimension_numbers = #tpu.dot_dimension_numbers<[1], [0], [0], [1], [0, 0, 1, 1], [], []>} : vector<4x248xbf16>, vector<248x128xbf16>, vector<4x128xf32> -> vector<4x128xf32>
    %c0_3 = arith.constant 0 : index
    %c0_4 = arith.constant 0 : index
    %26 = vector.load %arg3[%c0_3, %c0_4] : memref<4x128xf32, #tpu.memory_space<vmem>>, vector<4x128xf32>
    tpu.vector_store %arg3[%c0_3, %c0_4], %25 {strides = array<i32>} : memref<4x128xf32, #tpu.memory_space<vmem>>, vector<4x128xf32>,
    return
  }
  func.func @transform_0(%arg0: i32) -> (i32, i32) {
    %c0_i32 = arith.constant 0 : i32
    %c0_i32_0 = arith.constant 0 : i32
    return %arg0, %c0_i32 : i32, i32
  }
  func.func @transform_1(%arg0: i32) -> (i32, i32) {
    %c0_i32 = arith.constant 0 : i32
    %c0_i32_0 = arith.constant 0 : i32
    %c0_i32_1 = arith.constant 0 : i32
    return %c0_i32, %c0_i32_0 : i32, i32
  }
  func.func @transform_2(%arg0: i32) -> (i32, i32) {
    %c0_i32 = arith.constant 0 : i32
    %c0_i32_0 = arith.constant 0 : i32
    return %arg0, %c0_i32 : i32, i32
  }
}

</mosaic_0001>

<llo_original>
// kernel: forward.1
$region0: #{forward.1}
  #allocation0 [shape = 'u32[]', space=smem, size = 0x4, offset = 0x4, fixed_abs, tag = 'smem constant byte address 0x4 - core index']
  #allocation1 [shape = 'u32[144,128]{1,0:T(1,128)}', space=vmem, size = 0x12000, scoped, tag = 'internal scratch']
  %s0 = inlined_call_operand.vmem [shape: s32[4,4], index: 0, kind: input, shape index: {}]
  %s1 = inlined_call_operand.hbm [shape: bf16[248,128], index: 1, kind: input, shape index: {}]
  %s2 = inlined_call_operand.vmem [shape: f32[4,128], index: 2, kind: output, shape index: {}]
  %s3 = sld [smem:[#allocation0]]
  $region22: #{forward.1} parent=0
    _
  %s5 = ssub.s32 1, %s3
  %s6 = scalar_select 0, %s5, %s3
  $region1: #{forward.1} parent=0
    #allocation2 [shape = 'u8[63488]{0}', space=vmem, size = 0xf800, scoped, tag = 'input window, operand 1, single buffered']
    #allocation3 [shape = 's32[1]{0}', space=sflag, size = 0x4, scoped, tag = 'scoped memory for forward.1']
    %7 = vsyncpa [#allocation3], 0
    // Predicated region
    $region2: #{forward.1} parent=1 // pred_check
      _
    $region3: #{forward.1} parent=1 // pred_check_branch
      %9 = sbr.rel (0) target = $region5
    $region4: #{forward.1} parent=1 // pred_region
      _
    $region5: #{forward.1} parent=1 // pred_fallthru
      _
    // Predicated region
    $region6: #{forward.1} parent=1 // pred_check
      _
    $region7: #{forward.1} parent=1 // pred_check_branch
      %11 = sbr.rel (0) target = $region9
    $region8: #{forward.1} parent=1 // pred_region
      %s13 = ssub.s32 1984, 1984
      %14 = vsyncadd [#allocation3], %s13
      %s15 = sshll.u32 [#allocation2], 4
      %s16 = int_to_ptr.vmem [resolvable:$true] %s15
      %21 = dma.hbm_to_vmem [thread:$0]  %s1, 1984, %s16, [#allocation3], 64, 64, 4
    $region9: #{forward.1} parent=1 // pred_fallthru
      _
    // Predicated region
    $region10: #{forward.1} parent=1 // pred_check
      _
    $region11: #{forward.1} parent=1 // pred_check_branch
      %23 = sbr.rel (0) target = $region13
    $region12: #{forward.1} parent=1 // pred_region
      %24 = dma.done [#allocation3], 1984
    $region13: #{forward.1} parent=1 // pred_fallthru
      _
    %v26 = vld [vmem:[%s0] sm:$0xf]
    %v27 = vlaneseq
    %v28 = vand.u32 %v27, 127
    %v29 = vmul.u32 %v28, 62
    %v30 = vadd.s32 %v26, %v29
    %v31 = vadd.s32 %v28, 128
    %32 = vset.pattern.permute.xlu0 0
    %33 = vperm.xlu0 %32, %v30
    %v34 = vpop.permute.xlu0 %33
    %vm35 = vcmp.eq.s32.totalorder %v28, %v34
    %vm36 = vcmp.eq.s32.totalorder %v31, %v34
    %37 = vset.pattern.permute.xlu0 1
    %38 = vperm.xlu0 %37, %v30
    %v39 = vpop.permute.xlu0 %38
    %vm40 = vcmp.eq.s32.totalorder %v28, %v39
    %vm41 = vcmp.eq.s32.totalorder %v31, %v39
    %vm42 = vmor %vm35, %vm40
    %vm43 = vmor %vm36, %vm41
    %44 = vset.pattern.permute.xlu0 2
    %45 = vperm.xlu0 %44, %v30
    %v46 = vpop.permute.xlu0 %45
    %vm47 = vcmp.eq.s32.totalorder %v28, %v46
    %vm48 = vcmp.eq.s32.totalorder %v31, %v46
    %vm49 = vmor %vm42, %vm47
    %vm50 = vmor %vm43, %vm48
    %51 = vset.pattern.permute.xlu0 3
    %52 = vperm.xlu0 %51, %v30
    %v53 = vpop.permute.xlu0 %52
    %vm54 = vcmp.eq.s32.totalorder %v28, %v53
    %vm55 = vcmp.eq.s32.totalorder %v31, %v53
    %vm56 = vmor %vm49, %vm54
    %vm57 = vmor %vm50, %vm55
    %v58 = vsel %vm56, 1, 0
    %v59 = vsel %vm57, 1, 0
    %v60 = vcvt.s32.f32 %v58
    %v61 = vcvt.s32.f32 %v59
    %v62 = vpack.c.bf16 %v60, %v60
    %v63 = vpack.c.bf16 %v61, %v61
    %v64 = vld [vmem:[#allocation2] sm:$0xf]
    %v65 = vld [vmem:[#allocation2 + $0x4] sm:$0xf]
    %v66 = vld [vmem:[#allocation2 + $0x8] sm:$0xf]
    %v67 = vld [vmem:[#allocation2 + $0xc] sm:$0xf]
    %v68 = vld [vmem:[#allocation2 + $0x10] sm:$0xf]
    %v69 = vld [vmem:[#allocation2 + $0x14] sm:$0xf]
    %v70 = vld [vmem:[#allocation2 + $0x18] sm:$0xf]
    %v71 = vld [vmem:[#allocation2 + $0x1c] sm:$0xf]
    %v72 = vld [vmem:[#allocation2 + $0x20] sm:$0xf]
    %v73 = vld [vmem:[#allocation2 + $0x24] sm:$0xf]
    %v74 = vld [vmem:[#allocation2 + $0x28] sm:$0xf]
    %v75 = vld [vmem:[#allocation2 + $0x2c] sm:$0xf]
    %v76 = vld [vmem:[#allocation2 + $0x30] sm:$0xf]
    %v77 = vld [vmem:[#allocation2 + $0x34] sm:$0xf]
    %v78 = vld [vmem:[#allocation2 + $0x38] sm:$0xf]
    %v79 = vld [vmem:[#allocation2 + $0x3c] sm:$0xf]
    %v80 = vld [vmem:[#allocation2 + $0x40] sm:$0xf]
    %v81 = vld [vmem:[#allocation2 + $0x44] sm:$0xf]
    %v82 = vld [vmem:[#allocation2 + $0x48] sm:$0xf]
    %v83 = vld [vmem:[#allocation2 + $0x4c] sm:$0xf]
    %v84 = vld [vmem:[#allocation2 + $0x50] sm:$0xf]
    %v85 = vld [vmem:[#allocation2 + $0x54] sm:$0xf]
    %v86 = vld [vmem:[#allocation2 + $0x58] sm:$0xf]
    %v87 = vld [vmem:[#allocation2 + $0x5c] sm:$0xf]
    %v88 = vld [vmem:[#allocation2 + $0x60] sm:$0xf]
    %v89 = vld [vmem:[#allocation2 + $0x64] sm:$0xf]
    %v90 = vld [vmem:[#allocation2 + $0x68] sm:$0xf]
    %v91 = vld [vmem:[#allocation2 + $0x6c] sm:$0xf]
    %v92 = vld [vmem:[#allocation2 + $0x70] sm:$0xf]
    %v93 = vld [vmem:[#allocation2 + $0x74] sm:$0xf]
    %v94 = vld [vmem:[#allocation2 + $0x78] sm:$0xf]
    %v126 = vunpack.c.l.b16 %v64
    %v127 = vunpack.c.l.b16 %v65
    %v128 = vunpack.c.l.b16 %v66
    %v129 = vunpack.c.l.b16 %v67
    %v130 = vunpack.c.l.b16 %v68
    %v131 = vunpack.c.l.b16 %v69
    %v132 = vunpack.c.l.b16 %v70
    %v133 = vunpack.c.l.b16 %v71
    %v134 = vunpack.c.l.b16 %v72
    %v135 = vunpack.c.l.b16 %v73
    %v136 = vunpack.c.l.b16 %v74
    %v137 = vunpack.c.l.b16 %v75
    %v138 = vunpack.c.l.b16 %v76
    %v139 = vunpack.c.l.b16 %v77
    %v140 = vunpack.c.l.b16 %v78
    %v141 = vunpack.c.l.b16 %v79
    %v142 = vunpack.c.l.b16 %v80
    %v143 = vunpack.c.l.b16 %v81
    %v144 = vunpack.c.l.b16 %v82
    %v145 = vunpack.c.l.b16 %v83
    %v146 = vunpack.c.l.b16 %v84
    %v147 = vunpack.c.l.b16 %v85
    %v148 = vunpack.c.l.b16 %v86
    %v149 = vunpack.c.l.b16 %v87
    %v150 = vunpack.c.l.b16 %v88
    %v151 = vunpack.c.l.b16 %v89
    %v152 = vunpack.c.l.b16 %v90
    %v153 = vunpack.c.l.b16 %v91
    %v154 = vunpack.c.l.b16 %v92
    %v155 = vunpack.c.l.b16 %v93
    %v156 = vunpack.c.l.b16 %v94
    %v157 = vpack.c.b16 %v127, %v126
    %v158 = vpack.c.b16 %v129, %v128
    %v159 = vpack.c.b16 %v131, %v130
    %v160 = vpack.c.b16 %v133, %v132
    %v161 = vpack.c.b16 %v135, %v134
    %v162 = vpack.c.b16 %v137, %v136
    %v163 = vpack.c.b16 %v139, %v138
    %v164 = vpack.c.b16 %v141, %v140
    %v165 = vpack.c.b16 %v143, %v142
    %v166 = vpack.c.b16 %v145, %v144
    %v167 = vpack.c.b16 %v147, %v146
    %v168 = vpack.c.b16 %v149, %v148
    %v169 = vpack.c.b16 %v151, %v150
    %v170 = vpack.c.b16 %v153, %v152
    %v171 = vpack.c.b16 %v155, %v154
    %v172 = vpack.c.b16 %v156, %v156
    %vm188 = vcmask 982016
    %v190 = vsel %vm188, %v63, 0
    %vm192 = vcmask 1043456
    %v194 = vsel %vm192, %v172, 0
    %196 = vmatprep.subr.bf16.mxu0 0
    %197 = vmatpush1.bf16.msra.mxu0 %v164
    %198 = vmatprep.subr.bf16.mxu0 0
    %199 = vmatpush1.bf16.msra.mxu0 %v163
    %200 = vmatprep.subr.bf16.mxu0 0
    %201 = vmatpush1.bf16.msra.mxu0 %v162
    %202 = vmatprep.subr.bf16.mxu0 0
    %203 = vmatpush1.bf16.msra.mxu0 %v161
    %204 = vmatprep.subr.bf16.mxu0 0
    %205 = vmatpush1.bf16.msra.mxu0 %v160
    %206 = vmatprep.subr.bf16.mxu0 0
    %207 = vmatpush1.bf16.msra.mxu0 %v159
    %208 = vmatprep.subr.bf16.mxu0 0
    %209 = vmatpush1.bf16.msra.mxu0 %v158
    %210 = vmatprep.subr.bf16.mxu0 0
    %211 = vmatpush1.bf16.msra.mxu0 %v157
    %212 = vmatprep.subr.bf16.mxu0 0
    %213 = vmatpush2.bf16.msra.mxu0 %v194
    %214 = vmatprep.subr.bf16.mxu0 0
    %215 = vmatpush2.bf16.msra.mxu0 %v171
    %216 = vmatprep.subr.bf16.mxu0 0
    %217 = vmatpush2.bf16.msra.mxu0 %v170
    %218 = vmatprep.subr.bf16.mxu0 0
    %219 = vmatpush2.bf16.msra.mxu0 %v169
    %220 = vmatprep.subr.bf16.mxu0 0
    %221 = vmatpush2.bf16.msra.mxu0 %v168
    %222 = vmatprep.subr.bf16.mxu0 0
    %223 = vmatpush2.bf16.msra.mxu0 %v167
    %224 = vmatprep.subr.bf16.mxu0 0
    %225 = vmatpush2.bf16.msra.mxu0 %v166
    %226 = vmatprep.subr.bf16.mxu0 0
    %227 = vmatpush2.bf16.msra.mxu0 %v165
    %228 = vmatprep.mubr.bf16.mxu0 %v190
    %229 = vmatmul.mubr.bf16.gmra.mxu0 %v62
    %v230 = vpop.f32.mrf.mxu0
    %v231 = vadd.f32 0.0, %v230
    %v232 = vpop.f32.mrf.mxu0
    %v233 = vpop.f32.mrf.mxu0
    %v234 = vpop.f32.mrf.mxu0
    %235 = vdwg.mxu0
    %236 = vst [vmem:[%s2] sm:$0xf] %v231
    // Predicated region
    $region14: #{forward.1} parent=1 // pred_check
      _
    $region15: #{forward.1} parent=1 // pred_check_branch
      %238 = sbr.rel (0) target = $region17
    $region16: #{forward.1} parent=1 // pred_region
      _
    $region17: #{forward.1} parent=1 // pred_fallthru
      _
    // Predicated region
    $region18: #{forward.1} parent=1 // pred_check
      _
    $region19: #{forward.1} parent=1 // pred_check_branch
      %240 = sbr.rel (0) target = $region21
    $region20: #{forward.1} parent=1 // pred_region
      _
    $region21: #{forward.1} parent=1 // pred_fallthru
      _
    %241 = vsyncpa [#allocation3], 1

</llo_original>
